<compile_context>
chip_gen: v7x
topology: tpu7x:2x2x1
jax: 0.10.0
libtpu: 0.0.40
codegen_flags: <defaults>
</compile_context>

<pallas_src>
import numpy as np

import jax
import jax.numpy as jnp
from jax.experimental import pallas as pl
from jax.experimental.pallas import tpu as pltpu


# --------------------------------------------------------------------------- #
# Kernel
# --------------------------------------------------------------------------- #
def _conv3x3_banded(a, m_prev, m_next, w_ref, b_ref):
    """One 3x3 zero-padded conv as a single MXU matmul on lane-dense rows.

    a:      (R, W*Cin) f32, already activated; row r = (image, h), lanes = (w, ci).
    m_prev: (R, 1) f32, 1.0 where image row h-1 exists (kills sublane-roll wrap).
    m_next: (R, 1) f32, 1.0 where image row h+1 exists.
    w_ref:  (3*W*Cin, W*Cout) bf16 banded weight (dw taps + zero-pad folded in).
    b_ref:  (1, W*Cout) f32 bias, tiled per output column.
    returns (R, W*Cout) f32.
    """
    r = a.shape[0]
    prev_rows = pltpu.roll(a, 1, axis=0) * m_prev      # result[r] = a[r-1]  (dh = -1)
    next_rows = pltpu.roll(a, r - 1, axis=0) * m_next  # result[r] = a[r+1]  (dh = +1)
    # bf16 patch matrix: cast each shifted piece, concat stays half-size in VMEM.
    patches = jnp.concatenate(
        [prev_rows.astype(jnp.bfloat16),
         a.astype(jnp.bfloat16),
         next_rows.astype(jnp.bfloat16)], axis=1)      # (R, 3*W*Cin) bf16
    out = jnp.dot(patches, w_ref[...], preferred_element_type=jnp.float32)
    return out + b_ref[...]


def _resblock_kernel(x_ref, mask_ref, w1_ref, b1_ref, w2_ref, b2_ref, o_ref):
    x = x_ref[...]                                     # (R, W*C) f32, nb whole images
    m_prev = mask_ref[:, 0:1]
    m_next = mask_ref[:, 1:2]
    # Conv2dBlock #1: ReLU -> 3x3 conv (single banded matmul).
    h = _conv3x3_banded(jnp.maximum(x, 0.0), m_prev, m_next, w1_ref, b1_ref)
    # Conv2dBlock #2: ReLU -> 3x3 conv.
    y = _conv3x3_banded(jnp.maximum(h, 0.0), m_prev, m_next, w2_ref, b2_ref)
    o_ref[...] = (y + x).astype(o_ref.dtype)           # identity shortcut


# --------------------------------------------------------------------------- #
# Host-side (one-off, trace-safe) packing helpers
# --------------------------------------------------------------------------- #
def _pack_banded_weight(w_oihw, width):
    """OIHW 3x3 conv weight -> banded (3*W*Cin, W*Cout) bf16 matrix.

    B[kh*(W*Cin) + wi*Cin + ci, wo*Cout + co] = w[co, ci, kh, wi-wo+1] when
    |wi - wo| <= 1, else 0.  Zero entries implement the dw zero-padding.
    """
    c_out, c_in, kh, kw = w_oihw.shape
    assert kh == 3 and kw == 3
    wt = jnp.transpose(w_oihw, (2, 3, 1, 0)).astype(jnp.float32)  # (3, 3, Cin, Cout)
    sel = np.zeros((3, width, width), np.float32)                 # static selector
    for d in range(3):
        dw = d - 1
        for wo in range(width):
            wi = wo + dw
            if 0 <= wi < width:
                sel[d, wi, wo] = 1.0
    banded = jnp.einsum('dio,kdce->kicoe', jnp.asarray(sel), wt)  # (3,W,Cin,W,Cout)
    return banded.reshape(3 * width * c_in, width * c_out).astype(jnp.bfloat16)


def _row_masks(nb, h):
    """(nb*h, 2) f32: col 0 = 'row h-1 exists', col 1 = 'row h+1 exists'."""
    hrow = np.arange(nb * h) % h
    return jnp.asarray(
        np.stack([(hrow >= 1), (hrow <= h - 2)], axis=1).astype(np.float32))


def _pick_images_per_step(n, h, rows_per_step):
    """Images per grid step: amortize per-step overhead, keep >=2 steps if N>=2."""
    nb = max(1, min(rows_per_step // max(h, 1), n // 2 if n >= 2 else 1))
    while n % nb:
        nb -= 1
    if (nb * h) % 8 and nb != n:   # keep the sublane dim 8-aligned (or full-array)
        nb = n
    return nb


# --------------------------------------------------------------------------- #
# Wrappers
# --------------------------------------------------------------------------- #
def act_first_res_block_nhwc(x_nhwc, w1, b1, w2, b2, *, rows_per_step=512):
    """x_nhwc: (N, H, W, C); w*: (Cout, Cin, 3, 3) PyTorch OIHW conv weights."""
    N, H, W, c_in = x_nhwc.shape
    c_hid, c_out = w1.shape[0], w2.shape[0]
    assert c_in == c_out, "identity shortcut requires dim_in == dim_out"
    assert w1.shape[1] == c_in and w2.shape[1] == c_hid

    wc_in, wc_hid, wc_out = W * c_in, W * c_hid, W * c_out

    # One-off packing (tiny; done by XLA outside the kernel, trace-safe).
    bw1 = _pack_banded_weight(w1, W)                       # (3*wc_in, wc_hid) bf16
    bw2 = _pack_banded_weight(w2, W)                       # (3*wc_hid, wc_out) bf16
    b1w = jnp.tile(b1.astype(jnp.float32), (W,)).reshape(1, wc_hid)
    b2w = jnp.tile(b2.astype(jnp.float32), (W,)).reshape(1, wc_out)

    nb = _pick_images_per_step(N, H, rows_per_step)
    r_blk = nb * H
    masks = _row_masks(nb, H)                              # (r_blk, 2) f32, resident

    # Lane-dense row layout: free reshape, no transpose.
    x2d = x_nhwc.reshape(N * H, wc_in).astype(jnp.float32)

    # VMEM budget from the actual per-step footprint (cap under v7x's 64 MiB).
    weight_bytes = bw1.size * 2 + bw2.size * 2 + (b1w.size + b2w.size + masks.size) * 4
    io = 2 * r_blk * (wc_in + wc_out) * 4                  # double-buffered in/out blocks
    patches = r_blk * 3 * max(wc_in, wc_hid) * 2           # bf16 patch matrix (peak)
    tmps = 4 * r_blk * max(wc_in, wc_hid, wc_out) * 4      # rolled / hidden f32 temps
    vmem_bytes = int(min(max(2 * (io + patches + tmps + 2 * weight_bytes), 16 << 20),
                         56 << 20))

    flops = 2 * (N * H) * (3 * wc_in) * wc_hid + 2 * (N * H) * (3 * wc_hid) * wc_out
    bytes_accessed = (x2d.size * 4 + N * H * wc_out * 4
                      + bw1.size * 2 + bw2.size * 2
                      + (b1w.size + b2w.size + masks.size) * 4)

    out2d = pl.pallas_call(
        _resblock_kernel,
        out_shape=jax.ShapeDtypeStruct((N * H, wc_out), jnp.float32),
        grid=(N // nb,),
        in_specs=[
            pl.BlockSpec((r_blk, wc_in), lambda i: (i, 0)),        # nb images / step
            pl.BlockSpec((r_blk, 2), lambda i: (0, 0)),            # row masks (resident)
            pl.BlockSpec((3 * wc_in, wc_hid), lambda i: (0, 0)),   # banded w1
            pl.BlockSpec((1, wc_hid), lambda i: (0, 0)),           # b1
            pl.BlockSpec((3 * wc_hid, wc_out), lambda i: (0, 0)),  # banded w2
            pl.BlockSpec((1, wc_out), lambda i: (0, 0)),           # b2
        ],
        out_specs=pl.BlockSpec((r_blk, wc_out), lambda i: (i, 0)),
        compiler_params=pltpu.CompilerParams(
            dimension_semantics=("parallel",),
            vmem_limit_bytes=vmem_bytes),
        cost_estimate=pl.CostEstimate(flops=flops, transcendentals=0,
                                      bytes_accessed=bytes_accessed),
    )(x2d, masks, bw1, b1w, bw2, b2w)

    return out2d.reshape(N, H, W, c_out)


def act_first_res_block(x_nchw, w1, b1, w2, b2):
    """PyTorch-layout entry point: x (N, C, H, W).  The NCHW<->NHWC transposes are
    the only HBM layout round-trips; prefer act_first_res_block_nhwc directly."""
    x_nhwc = jnp.transpose(x_nchw, (0, 2, 3, 1))
    out_nhwc = act_first_res_block_nhwc(x_nhwc, w1, b1, w2, b2)
    return jnp.transpose(out_nhwc, (0, 3, 1, 2))


# --------------------------------------------------------------------------- #
# Reference + test
# --------------------------------------------------------------------------- #
def _reference(x, w1, b1, w2, b2):
    """Pure-JAX f32 replica of the PyTorch forward (NCHW / OIHW)."""
    def act_conv(h, w, b):
        h = jnp.maximum(h, 0.0)
        out = jax.lax.conv_general_dilated(
            h, w, window_strides=(1, 1), padding=((1, 1), (1, 1)),
            dimension_numbers=("NCHW", "OIHW", "NCHW"))
        return out + b[None, :, None, None]
    return act_conv(act_conv(x, w1, b1), w2, b2) + x


if __name__ == "__main__":
    N, C, H, W = 2, 4, 16, 16            # dim_in = dim_hidden = dim_out = 4
    key = jax.random.PRNGKey(0)
    kx, k1, kb1, k2, kb2 = jax.random.split(key, 5)

    x = jax.random.normal(kx, (N, C, H, W), dtype=jnp.float32)
    w1 = 0.2 * jax.random.normal(k1, (C, C, 3, 3), dtype=jnp.float32)
    b1 = 0.1 * jax.random.normal(kb1, (C,), dtype=jnp.float32)
    w2 = 0.2 * jax.random.normal(k2, (C, C, 3, 3), dtype=jnp.float32)
    b2 = 0.1 * jax.random.normal(kb2, (C,), dtype=jnp.float32)

    out = jax.jit(act_first_res_block)(x, w1, b1, w2, b2)
    out = jax.block_until_ready(out)

    ref = _reference(x, w1, b1, w2, b2)
    assert out.shape == ref.shape == (N, C, H, W)
    # bf16 matmul inputs (f32 accumulation) -> loosened tolerance vs f32 reference.
    assert jnp.allclose(out, ref, atol=5e-2, rtol=5e-2), (
        float(jnp.max(jnp.abs(out - ref))))
    print("KERNEL_OK")
</pallas_src>

<mosaic_0001>
module attributes {stable_mosaic.version = 11 : i64} {
  func.func @_resblock_kernel(%arg0: i32, %arg1: memref<16x64xf32, #tpu.memory_space<vmem>>, %arg2: memref<16x2xf32, #tpu.memory_space<vmem>>, %arg3: memref<192x64xbf16, #tpu.memory_space<vmem>>, %arg4: memref<1x64xf32, #tpu.memory_space<vmem>>, %arg5: memref<192x64xbf16, #tpu.memory_space<vmem>>, %arg6: memref<1x64xf32, #tpu.memory_space<vmem>>, %arg7: memref<16x64xf32, #tpu.memory_space<vmem>>) attributes {dimension_semantics = [#tpu.dimension_semantics<parallel>], iteration_bounds = array<i64: 2>, scalar_prefetch = 0 : i64, scratch_operands = 0 : i64, tpu.core_type = #tpu.core_type<tc>, window_params = [{transform_indices = @transform_0, window_bounds = array<i64: 16, 64>}, {pipeline_mode = #tpu.pipeline_mode<synchronous>, transform_indices = @transform_1, window_bounds = array<i64: 16, 2>}, {pipeline_mode = #tpu.pipeline_mode<synchronous>, transform_indices = @transform_2, window_bounds = array<i64: 192, 64>}, {pipeline_mode = #tpu.pipeline_mode<synchronous>, transform_indices = @transform_3, window_bounds = array<i64: 1, 64>}, {pipeline_mode = #tpu.pipeline_mode<synchronous>, transform_indices = @transform_4, window_bounds = array<i64: 192, 64>}, {pipeline_mode = #tpu.pipeline_mode<synchronous>, transform_indices = @transform_5, window_bounds = array<i64: 1, 64>}, {transform_indices = @transform_6, window_bounds = array<i64: 16, 64>}]} {
    %c0 = arith.constant 0 : index
    %c0_0 = arith.constant 0 : index
    %0 = vector.load %arg1[%c0, %c0_0] : memref<16x64xf32, #tpu.memory_space<vmem>>, vector<16x64xf32>
    %c0_1 = arith.constant 0 : index
    %c0_2 = arith.constant 0 : index
    %1 = vector.load %arg2[%c0_1, %c0_2] : memref<16x2xf32, #tpu.memory_space<vmem>>, vector<16x1xf32>
    %c0_3 = arith.constant 0 : index
    %c1 = arith.constant 1 : index
    %2 = vector.load %arg2[%c0_3, %c1] : memref<16x2xf32, #tpu.memory_space<vmem>>, vector<16x1xf32>
    %cst = arith.constant 0.000000e+00 : f32
    %3 = vector.broadcast %cst : f32 to vector<16x64xf32>
    %4 = arith.maximumf %0, %3 : vector<16x64xf32>
    %c1_i32 = arith.constant 1 : i32
    %5 = tpu.dynamic_rotate %4 by %c1_i32 dim 0 : vector<16x64xf32>, i32 -> vector<16x64xf32>
    %6 = vector.broadcast %1 : vector<16x1xf32> to vector<16x64xf32>
    %7 = arith.mulf %5, %6 : vector<16x64xf32>
    %c15_i32 = arith.constant 15 : i32
    %8 = tpu.dynamic_rotate %4 by %c15_i32 dim 0 : vector<16x64xf32>, i32 -> vector<16x64xf32>
    %9 = vector.broadcast %2 : vector<16x1xf32> to vector<16x64xf32>
    %10 = arith.mulf %8, %9 : vector<16x64xf32>
    %11 = arith.truncf %7 : vector<16x64xf32> to vector<16x64xbf16>
    %12 = arith.truncf %4 : vector<16x64xf32> to vector<16x64xbf16>
    %13 = arith.truncf %10 : vector<16x64xf32> to vector<16x64xbf16>
    %14 = tpu.concatenate %11, %12, %13 in 1 : vector<16x64xbf16>, vector<16x64xbf16>, vector<16x64xbf16> -> vector<16x192xbf16>
    %c0_4 = arith.constant 0 : index
    %c0_5 = arith.constant 0 : index
    %15 = vector.load %arg3[%c0_4, %c0_5] : memref<192x64xbf16, #tpu.memory_space<vmem>>, vector<192x64xbf16>
    %cst_6 = arith.constant dense<0.000000e+00> : vector<16x64xf32>
    %16 = tpu.matmul %14, %15, %cst_6 {dimension_numbers = #tpu.dot_dimension_numbers<[1], [0], [0], [1], [0, 0, 1, 1], [], []>} : vector<16x192xbf16>, vector<192x64xbf16>, vector<16x64xf32> -> vector<16x64xf32>
    %c0_7 = arith.constant 0 : index
    %c0_8 = arith.constant 0 : index
    %17 = vector.load %arg4[%c0_7, %c0_8] : memref<1x64xf32, #tpu.memory_space<vmem>>, vector<1x64xf32>
    %18 = vector.broadcast %17 : vector<1x64xf32> to vector<16x64xf32>
    %19 = arith.addf %16, %18 : vector<16x64xf32>
    %cst_9 = arith.constant 0.000000e+00 : f32
    %20 = vector.broadcast %cst_9 : f32 to vector<16x64xf32>
    %21 = arith.maximumf %19, %20 : vector<16x64xf32>
    %c1_i32_10 = arith.constant 1 : i32
    %22 = tpu.dynamic_rotate %21 by %c1_i32_10 dim 0 : vector<16x64xf32>, i32 -> vector<16x64xf32>
    %23 = vector.broadcast %1 : vector<16x1xf32> to vector<16x64xf32>
    %24 = arith.mulf %22, %23 : vector<16x64xf32>
    %c15_i32_11 = arith.constant 15 : i32
    %25 = tpu.dynamic_rotate %21 by %c15_i32_11 dim 0 : vector<16x64xf32>, i32 -> vector<16x64xf32>
    %26 = vector.broadcast %2 : vector<16x1xf32> to vector<16x64xf32>
    %27 = arith.mulf %25, %26 : vector<16x64xf32>
    %28 = arith.truncf %24 : vector<16x64xf32> to vector<16x64xbf16>
    %29 = arith.truncf %21 : vector<16x64xf32> to vector<16x64xbf16>
    %30 = arith.truncf %27 : vector<16x64xf32> to vector<16x64xbf16>
    %31 = tpu.concatenate %28, %29, %30 in 1 : vector<16x64xbf16>, vector<16x64xbf16>, vector<16x64xbf16> -> vector<16x192xbf16>
    %c0_12 = arith.constant 0 : index
    %c0_13 = arith.constant 0 : index
    %32 = vector.load %arg5[%c0_12, %c0_13] : memref<192x64xbf16, #tpu.memory_space<vmem>>, vector<192x64xbf16>
    %cst_14 = arith.constant dense<0.000000e+00> : vector<16x64xf32>
    %33 = tpu.matmul %31, %32, %cst_14 {dimension_numbers = #tpu.dot_dimension_numbers<[1], [0], [0], [1], [0, 0, 1, 1], [], []>} : vector<16x192xbf16>, vector<192x64xbf16>, vector<16x64xf32> -> vector<16x64xf32>
    %c0_15 = arith.constant 0 : index
    %c0_16 = arith.constant 0 : index
    %34 = vector.load %arg6[%c0_15, %c0_16] : memref<1x64xf32, #tpu.memory_space<vmem>>, vector<1x64xf32>
    %35 = vector.broadcast %34 : vector<1x64xf32> to vector<16x64xf32>
    %36 = arith.addf %33, %35 : vector<16x64xf32>
    %37 = arith.addf %36, %0 : vector<16x64xf32>
    %c0_17 = arith.constant 0 : index
    %c0_18 = arith.constant 0 : index
    %38 = vector.load %arg7[%c0_17, %c0_18] : memref<16x64xf32, #tpu.memory_space<vmem>>, vector<16x64xf32>
    tpu.vector_store %arg7[%c0_17, %c0_18], %37 {strides = array<i32>} : memref<16x64xf32, #tpu.memory_space<vmem>>, vector<16x64xf32>,
    return
  }
  func.func @transform_0(%arg0: i32) -> (i32, i32) {
    %c0_i32 = arith.constant 0 : i32
    %c0_i32_0 = arith.constant 0 : i32
    return %arg0, %c0_i32 : i32, i32
  }
  func.func @transform_1(%arg0: i32) -> (i32, i32) {
    %c0_i32 = arith.constant 0 : i32
    %c0_i32_0 = arith.constant 0 : i32
    %c0_i32_1 = arith.constant 0 : i32
    return %c0_i32, %c0_i32_0 : i32, i32
  }
  func.func @transform_2(%arg0: i32) -> (i32, i32) {
    %c0_i32 = arith.constant 0 : i32
    %c0_i32_0 = arith.constant 0 : i32
    %c0_i32_1 = arith.constant 0 : i32
    return %c0_i32, %c0_i32_0 : i32, i32
  }
  func.func @transform_3(%arg0: i32) -> (i32, i32) {
    %c0_i32 = arith.constant 0 : i32
    %c0_i32_0 = arith.constant 0 : i32
    %c0_i32_1 = arith.constant 0 : i32
    return %c0_i32, %c0_i32_0 : i32, i32
  }
  func.func @transform_4(%arg0: i32) -> (i32, i32) {
    %c0_i32 = arith.constant 0 : i32
    %c0_i32_0 = arith.constant 0 : i32
    %c0_i32_1 = arith.constant 0 : i32
    return %c0_i32, %c0_i32_0 : i32, i32
  }
  func.func @transform_5(%arg0: i32) -> (i32, i32) {
    %c0_i32 = arith.constant 0 : i32
    %c0_i32_0 = arith.constant 0 : i32
    %c0_i32_1 = arith.constant 0 : i32
    return %c0_i32, %c0_i32_0 : i32, i32
  }
  func.func @transform_6(%arg0: i32) -> (i32, i32) {
    %c0_i32 = arith.constant 0 : i32
    %c0_i32_0 = arith.constant 0 : i32
    return %arg0, %c0_i32 : i32, i32
  }
}

</mosaic_0001>

<llo_original>
// kernel: tile.13
$region0: #{tile.13}
  #allocation0 [shape = 's32[1]{0}', space=sflag, size = 0x4, scoped, tag = 'scoped memory for tile.13']
  %s0 = inlined_call_operand.vmem [shape: f32[4], index: 0, kind: input, shape index: {}]
  %s1 = inlined_call_operand.vmem [shape: f32[16,4], index: 1, kind: output, shape index: {}]
  // Predicated region
  $region2: #{tile.13} parent=0 // pred_check
    _
  $region3: #{tile.13} parent=0 // pred_check_branch
    %3 = sbr.rel (0) target = $region5
  $region4: #{tile.13} parent=0 // pred_region
    _
  $region5: #{tile.13} parent=0 // pred_fallthru
    _
  %v4 = vld [vmem:[%s0] ss:$0 sm:$0xff]
  %5 = vst [vmem:[%s1] sm:$0xff] %v4
  %s6 = scalar_lea.vmem %s1, 8
  %7 = vst [vmem:[%s6] sm:$0xff] %v4

// kernel: tile.14
$region0: #{tile.14}
  %s0 = inlined_call_operand.vmem [shape: f32[16,4], index: 0, kind: input, shape index: {}]
  %s1 = inlined_call_operand.vmem [shape: f32[1,64], index: 1, kind: output, shape index: {}]
  $region1: #{tile.14} parent=0
    #allocation0 [shape = 'u8[4096]{0}', space=vmem, size = 0x1000, scoped, tag = 'scoped mem for output reshape']
    %v2 = vld [vmem:[%s0] sm:$0x1]
    %vm3 = vcmask 31744
    %4 = vst.msk [vmem:[#allocation0] sm:$0x1] %vm3, %v2
    %s5 = scalar_lea.vmem %s0, 15
    %v6 = vld [vmem:[%s5] sm:$0x1]
    %7 = vrot.lane.b32.xlu0 %v6, 60
    %v8 = vpop.permute.xlu0 %7
    %vm9 = vcmask 523744
    %10 = vst.msk [vmem:[#allocation0] sm:$0x1] %vm9, %v8
    %s11 = scalar_lea.vmem %s0, 14
    %v12 = vld [vmem:[%s11] sm:$0x1]
    %13 = vrot.lane.b32.xlu0 %v12, 56
    %v14 = vpop.permute.xlu0 %13
    %vm15 = vcmask 490944
    %16 = vst.msk [vmem:[#allocation0] sm:$0x1] %vm15, %v14
    %s17 = scalar_lea.vmem %s0, 13
    %v18 = vld [vmem:[%s17] sm:$0x1]
    %19 = vrot.lane.b32.xlu0 %v18, 52
    %v20 = vpop.permute.xlu0 %19
    %vm21 = vcmask 458144
    %22 = vst.msk [vmem:[#allocation0] sm:$0x1] %vm21, %v20
    %s23 = scalar_lea.vmem %s0, 12
    %v24 = vld [vmem:[%s23] sm:$0x1]
    %25 = vrot.lane.b32.xlu0 %v24, 48
    %v26 = vpop.permute.xlu0 %25
    %vm27 = vcmask 425344
    %28 = vst.msk [vmem:[#allocation0] sm:$0x1] %vm27, %v26
    %s29 = scalar_lea.vmem %s0, 11
    %v30 = vld [vmem:[%s29] sm:$0x1]
    %31 = vrot.lane.b32.xlu0 %v30, 44
    %v32 = vpop.permute.xlu0 %31
    %vm33 = vcmask 392544
    %34 = vst.msk [vmem:[#allocation0] sm:$0x1] %vm33, %v32
    %s35 = scalar_lea.vmem %s0, 10
    %v36 = vld [vmem:[%s35] sm:$0x1]
    %37 = vrot.lane.b32.xlu0 %v36, 40
    %v38 = vpop.permute.xlu0 %37
    %vm39 = vcmask 359744
    %40 = vst.msk [vmem:[#allocation0] sm:$0x1] %vm39, %v38
    %s41 = scalar_lea.vmem %s0, 9
    %v42 = vld [vmem:[%s41] sm:$0x1]
    %43 = vrot.lane.b32.xlu0 %v42, 36
    %v44 = vpop.permute.xlu0 %43
    %vm45 = vcmask 326944
    %46 = vst.msk [vmem:[#allocation0] sm:$0x1] %vm45, %v44
    %s47 = scalar_lea.vmem %s0, 8
    %v48 = vld [vmem:[%s47] sm:$0x1]
    %49 = vrot.lane.b32.xlu0 %v48, 32
    %v50 = vpop.permute.xlu0 %49
    %vm51 = vcmask 294144
    %52 = vst.msk [vmem:[#allocation0] sm:$0x1] %vm51, %v50
    %s53 = scalar_lea.vmem %s0, 7
    %v54 = vld [vmem:[%s53] sm:$0x1]
    %55 = vrot.lane.b32.xlu0 %v54, 28
    %v56 = vpop.permute.xlu0 %55
    %vm57 = vcmask 261344
    %58 = vst.msk [vmem:[#allocation0] sm:$0x1] %vm57, %v56
    %s59 = scalar_lea.vmem %s0, 6
    %v60 = vld [vmem:[%s59] sm:$0x1]
    %61 = vrot.lane.b32.xlu0 %v60, 24
    %v62 = vpop.permute.xlu0 %61
    %vm63 = vcmask 228544
    %64 = vst.msk [vmem:[#allocation0] sm:$0x1] %vm63, %v62
    %s65 = scalar_lea.vmem %s0, 5
    %v66 = vld [vmem:[%s65] sm:$0x1]
    %67 = vrot.lane.b32.xlu0 %v66, 20
    %v68 = vpop.permute.xlu0 %67
    %vm69 = vcmask 195744
    %70 = vst.msk [vmem:[#allocation0] sm:$0x1] %vm69, %v68
    %s71 = scalar_lea.vmem %s0, 4
    %v72 = vld [vmem:[%s71] sm:$0x1]
    %73 = vrot.lane.b32.xlu0 %v72, 16
    %v74 = vpop.permute.xlu0 %73
    %vm75 = vcmask 162944
    %76 = vst.msk [vmem:[#allocation0] sm:$0x1] %vm75, %v74
    %s77 = scalar_lea.vmem %s0, 3
    %v78 = vld [vmem:[%s77] sm:$0x1]
    %79 = vrot.lane.b32.xlu0 %v78, 12
    %v80 = vpop.permute.xlu0 %79
    %vm81 = vcmask 130144
    %82 = vst.msk [vmem:[#allocation0] sm:$0x1] %vm81, %v80
    %s83 = scalar_lea.vmem %s0, 2
    %v84 = vld [vmem:[%s83] sm:$0x1]
    %85 = vrot.lane.b32.xlu0 %v84, 8
    %v86 = vpop.permute.xlu0 %85
    %vm87 = vcmask 97344
    %88 = vst.msk [vmem:[#allocation0] sm:$0x1] %vm87, %v86
    %s89 = scalar_lea.vmem %s0, 1
    %v90 = vld [vmem:[%s89] sm:$0x1]
    %91 = vrot.lane.b32.xlu0 %v90, 4
    %v92 = vpop.permute.xlu0 %91
    %vm93 = vcmask 64544
    %94 = vst.msk [vmem:[#allocation0] sm:$0x1] %vm93, %v92
    %s96 = sshllo.u32 0, 1
    %v98 = vld [vmem:[#allocation0] sm:%s96]
    %s99 = sshllo.u32 0, 1
    %100 = vst [vmem:[%s1] sm:%s99] %v98

// kernel: act_first_res_block.1
$region0: #{act_first_res_block.1}
  #allocation0 [shape = 'u32[]', space=smem, size = 0x4, offset = 0x4, fixed_abs, tag = 'smem constant byte address 0x4 - core index']
  #allocation1 [shape = 'u32[144,128]{1,0:T(1,128)}', space=vmem, size = 0x12000, scoped, tag = 'internal scratch']
  %s0 = inlined_call_operand.vmem [shape: f32[32,64], index: 0, kind: input, shape index: {}]
  %s1 = inlined_call_operand.vmem [shape: f32[16,2], index: 1, kind: input, shape index: {}]
  %s2 = inlined_call_operand.vmem [shape: bf16[192,64], index: 2, kind: input, shape index: {}]
  %s3 = inlined_call_operand.vmem [shape: f32[1,64], index: 3, kind: input, shape index: {}]
  %s4 = inlined_call_operand.vmem [shape: bf16[192,64], index: 4, kind: input, shape index: {}]
  %s5 = inlined_call_operand.vmem [shape: f32[1,64], index: 5, kind: input, shape index: {}]
  %s6 = inlined_call_operand.vmem [shape: f32[32,64], index: 6, kind: output, shape index: {}]
  %s7 = sld [smem:[#allocation0]]
  $region57: #{act_first_res_block.1} parent=0
    _
  %s9 = ssub.s32 1, %s7
  %s10 = scalar_select 0, %s9, %s7
  loop: start=0, step=1, limit=4
  $region2: #{act_first_res_block.1} parent=0 // loop_pre_header
    _
  $region3: #{act_first_res_block.1} parent=0 // loop_header
    %s12 = sphi 0, %s16
    %p13 = scmp.ge.s32.totalorder %s12, 4
    %s22 = sphi 0, %s24
    %s25 = sphi 0, %s22
    %s26 = sphi 0, %s25
    %s42 = sphi 0, %s26
    %s46 = sphi 0, %s46
    %s48 = sphi 0, %s46
    %s49 = sphi 0, %s48
    %s63 = sphi 0, %s49
    %s67 = sphi 0, %s67
    %s69 = sphi 0, %s67
    %s70 = sphi 0, %s69
    %s84 = sphi 0, %s70
    %s88 = sphi 0, %s88
    %s90 = sphi 0, %s88
    %s91 = sphi 0, %s90
    %s105 = sphi 0, %s91
    %s109 = sphi 0, %s109
    %s111 = sphi 0, %s109
    %s112 = sphi 0, %s111
    %s126 = sphi 0, %s112
    %s130 = sphi 0, %s130
    %s132 = sphi 0, %s130
    %s133 = sphi 0, %s132
    %s147 = sphi 0, %s133
    %s153 = sphi 0, %s155
    %s156 = sphi 0, %s153
    %s157 = sphi 0, %s156
    %s173 = sphi 0, %s157
  $region4: #{act_first_res_block.1} parent=0 // loop_header_branch
    %15 = sbr.rel (%p13) target = $region8
  $region5: #{act_first_res_block.1} parent=0 // loop_body
    %s17 = ssub.s32 %s12, 1
    %s18 = ssub.s32 %s12, 2
    %s19 = sadd.s32 %s12, 1
    %s20 = ssub.s32 %s12, %s19
    %p21 = scmp.eq.s32.totalorder %s20, 0
    %s23 = sadd.s32 %s22, 1
    %s24 = scalar_select %p21, %s22, %s23
    %p27 = pneg %p21
    %p28 = scmp.eq.s32.totalorder %s12, 1
    %p29 = por %p27, %p28
    %p30 = scmp.ne.s32.totalorder %s22, %s25
    %p31 = scmp.eq.s32.totalorder %s12, 0
    %p32 = por %p30, %p31
    %p33 = scmp.ne.s32.totalorder %s22, %s25
    %p34 = scmp.eq.s32.totalorder %s17, 1
    %p35 = por %p33, %p34
    %p36 = scmp.ne.s32.totalorder %s25, %s26
    %p37 = scmp.eq.s32.totalorder %s17, 0
    %p38 = por %p36, %p37
    %p39 = scmp.ne.s32.totalorder %s25, %s26
    %p40 = scmp.eq.s32.totalorder %s18, 1
    %p41 = por %p39, %p40
    %p43 = scmp.ne.s32.totalorder %s26, %s42
    %p44 = scmp.eq.s32.totalorder %s18, 0
    %p45 = por %p43, %p44
    %s47 = sadd.s32 %s46, 1
    %p50 = scmp.eq.s32.totalorder %s12, 1
    %p51 = scmp.ne.s32.totalorder %s46, %s48
    %p52 = scmp.eq.s32.totalorder %s12, 0
    %p53 = por %p51, %p52
    %p54 = scmp.ne.s32.totalorder %s46, %s48
    %p55 = scmp.eq.s32.totalorder %s17, 1
    %p56 = por %p54, %p55
    %p57 = scmp.ne.s32.totalorder %s48, %s49
    %p58 = scmp.eq.s32.totalorder %s17, 0
    %p59 = por %p57, %p58
    %p60 = scmp.ne.s32.totalorder %s48, %s49
    %p61 = scmp.eq.s32.totalorder %s18, 1
    %p62 = por %p60, %p61
    %p64 = scmp.ne.s32.totalorder %s49, %s63
    %p65 = scmp.eq.s32.totalorder %s18, 0
    %p66 = por %p64, %p65
    %s68 = sadd.s32 %s67, 1
    %p71 = scmp.eq.s32.totalorder %s12, 1
    %p72 = scmp.ne.s32.totalorder %s67, %s69
    %p73 = scmp.eq.s32.totalorder %s12, 0
    %p74 = por %p72, %p73
    %p75 = scmp.ne.s32.totalorder %s67, %s69
    %p76 = scmp.eq.s32.totalorder %s17, 1
    %p77 = por %p75, %p76
    %p78 = scmp.ne.s32.totalorder %s69, %s70
    %p79 = scmp.eq.s32.totalorder %s17, 0
    %p80 = por %p78, %p79
    %p81 = scmp.ne.s32.totalorder %s69, %s70
    %p82 = scmp.eq.s32.totalorder %s18, 1
    %p83 = por %p81, %p82
    %p85 = scmp.ne.s32.totalorder %s70, %s84
    %p86 = scmp.eq.s32.totalorder %s18, 0
    %p87 = por %p85, %p86
    %s89 = sadd.s32 %s88, 1
    %p92 = scmp.eq.s32.totalorder %s12, 1
    %p93 = scmp.ne.s32.totalorder %s88, %s90
    %p94 = scmp.eq.s32.totalorder %s12, 0
    %p95 = por %p93, %p94
    %p96 = scmp.ne.s32.totalorder %s88, %s90
    %p97 = scmp.eq.s32.totalorder %s17, 1
    %p98 = por %p96, %p97
    %p99 = scmp.ne.s32.totalorder %s90, %s91
    %p100 = scmp.eq.s32.totalorder %s17, 0
    %p101 = por %p99, %p100
    %p102 = scmp.ne.s32.totalorder %s90, %s91
    %p103 = scmp.eq.s32.totalorder %s18, 1
    %p104 = por %p102, %p103
    %p106 = scmp.ne.s32.totalorder %s91, %s105
    %p107 = scmp.eq.s32.totalorder %s18, 0
    %p108 = por %p106, %p107
    %s110 = sadd.s32 %s109, 1
    %p113 = scmp.eq.s32.totalorder %s12, 1
    %p114 = scmp.ne.s32.totalorder %s109, %s111
    %p115 = scmp.eq.s32.totalorder %s12, 0
    %p116 = por %p114, %p115
    %p117 = scmp.ne.s32.totalorder %s109, %s111
    %p118 = scmp.eq.s32.totalorder %s17, 1
    %p119 = por %p117, %p118
    %p120 = scmp.ne.s32.totalorder %s111, %s112
    %p121 = scmp.eq.s32.totalorder %s17, 0
    %p122 = por %p120, %p121
    %p123 = scmp.ne.s32.totalorder %s111, %s112
    %p124 = scmp.eq.s32.totalorder %s18, 1
    %p125 = por %p123, %p124
    %p127 = scmp.ne.s32.totalorder %s112, %s126
    %p128 = scmp.eq.s32.totalorder %s18, 0
    %p129 = por %p127, %p128
    %s131 = sadd.s32 %s130, 1
    %p134 = scmp.eq.s32.totalorder %s12, 1
    %p135 = scmp.ne.s32.totalorder %s130, %s132
    %p136 = scmp.eq.s32.totalorder %s12, 0
    %p137 = por %p135, %p136
    %p138 = scmp.ne.s32.totalorder %s130, %s132
    %p139 = scmp.eq.s32.totalorder %s17, 1
    %p140 = por %p138, %p139
    %p141 = scmp.ne.s32.totalorder %s132, %s133
    %p142 = scmp.eq.s32.totalorder %s17, 0
    %p143 = por %p141, %p142
    %p144 = scmp.ne.s32.totalorder %s132, %s133
    %p145 = scmp.eq.s32.totalorder %s18, 1
    %p146 = por %p144, %p145
    %p148 = scmp.ne.s32.totalorder %s133, %s147
    %p149 = scmp.eq.s32.totalorder %s18, 0
    %p150 = por %p148, %p149
    %s151 = ssub.s32 %s12, %s19
    %p152 = scmp.eq.s32.totalorder %s151, 0
    %s154 = sadd.s32 %s153, 1
    %s155 = scalar_select %p152, %s153, %s154
    %p158 = pneg %p152
    %p159 = scmp.eq.s32.totalorder %s12, 1
    %p160 = por %p158, %p159
    %p161 = scmp.ne.s32.totalorder %s153, %s156
    %p162 = scmp.eq.s32.totalorder %s12, 0
    %p163 = por %p161, %p162
    %p164 = scmp.ne.s32.totalorder %s153, %s156
    %p165 = scmp.eq.s32.totalorder %s17, 1
    %p166 = por %p164, %p165
    %p167 = scmp.ne.s32.totalorder %s156, %s157
    %p168 = scmp.eq.s32.totalorder %s17, 0
    %p169 = por %p167, %p168
    %p170 = scmp.ne.s32.totalorder %s156, %s157
    %p171 = scmp.eq.s32.totalorder %s18, 1
    %p172 = por %p170, %p171
    %p174 = scmp.ne.s32.totalorder %s157, %s173
    %p175 = scmp.eq.s32.totalorder %s18, 0
    %p176 = por %p174, %p175
    %p177 = scmp.le.s32.totalorder 1, %s12
    %p178 = scmp.lt.s32.totalorder %s12, 3
    %p179 = pnand %p177, %p178
    %p180 = pneg %p179
    // Predicated region
    $region9: #{act_first_res_block.1} parent=5 // pred_check
      _
    $region10: #{act_first_res_block.1} parent=5 // pred_check_branch
      %182 = sbr.rel (%p179) target = $region12
    $region11: #{act_first_res_block.1} parent=5 // pred_region
      %s183 = ssub.s32 %s12, 1
      // Predicated region
      $region13: #{act_first_res_block.1} parent=11 // pred_check
        %p184 = pneg %p59
      $region14: #{act_first_res_block.1} parent=11 // pred_check_branch
        %186 = sbr.rel (%p184) target = $region16
      $region15: #{act_first_res_block.1} parent=11 // pred_region
        _
      $region16: #{act_first_res_block.1} parent=11 // pred_fallthru
        _
      // Predicated region
      $region17: #{act_first_res_block.1} parent=11 // pred_check
        %p187 = pneg %p80
      $region18: #{act_first_res_block.1} parent=11 // pred_check_branch
        %189 = sbr.rel (%p187) target = $region20
      $region19: #{act_first_res_block.1} parent=11 // pred_region
        _
      $region20: #{act_first_res_block.1} parent=11 // pred_fallthru
        _
      // Predicated region
      $region21: #{act_first_res_block.1} parent=11 // pred_check
        %p190 = pneg %p101
      $region22: #{act_first_res_block.1} parent=11 // pred_check_branch
        %192 = sbr.rel (%p190) target = $region24
      $region23: #{act_first_res_block.1} parent=11 // pred_region
        _
      $region24: #{act_first_res_block.1} parent=11 // pred_fallthru
        _
      // Predicated region
      $region25: #{act_first_res_block.1} parent=11 // pred_check
        %p193 = pneg %p122
      $region26: #{act_first_res_block.1} parent=11 // pred_check_branch
        %195 = sbr.rel (%p193) target = $region28
      $region27: #{act_first_res_block.1} parent=11 // pred_region
        _
      $region28: #{act_first_res_block.1} parent=11 // pred_fallthru
        _
      // Predicated region
      $region29: #{act_first_res_block.1} parent=11 // pred_check
        %p196 = pneg %p143
      $region30: #{act_first_res_block.1} parent=11 // pred_check_branch
        %198 = sbr.rel (%p196) target = $region32
      $region31: #{act_first_res_block.1} parent=11 // pred_region
        _
      $region32: #{act_first_res_block.1} parent=11 // pred_fallthru
        _
    $region12: #{act_first_res_block.1} parent=5 // pred_fallthru
      _
    %p199 = scmp.lt.s32.totalorder %s12, 2
    // Predicated region
    $region33: #{act_first_res_block.1} parent=5 // pred_check
      %p200 = pneg %p199
    $region34: #{act_first_res_block.1} parent=5 // pred_check_branch
      %202 = sbr.rel (%p200) target = $region36
    $region35: #{act_first_res_block.1} parent=5 // pred_region
      // Predicated region
      $region37: #{act_first_res_block.1} parent=35 // pred_check
        %p203 = pneg %p32
      $region38: #{act_first_res_block.1} parent=35 // pred_check_branch
        %205 = sbr.rel (%p203) target = $region40
      $region39: #{act_first_res_block.1} parent=35 // pred_region
        %s206 = smul.u32 2, %s12
        %p207 = scmp.lt.s32.totalorder %s206, 3
        %s208 = scalar_select %p207, %s206, 3
        %s209 = smul.addr %s208, 8
        %s210 = scalar_lea.vmem %s0, %s209
        %s211 = smul.u32 2, %s12
      $region40: #{act_first_res_block.1} parent=35 // pred_fallthru
        _
    $region36: #{act_first_res_block.1} parent=5 // pred_fallthru
      _
    %p212 = scmp.le.s32.totalorder 1, %s12
    %p213 = scmp.lt.s32.totalorder %s12, 3
    %p214 = pnand %p212, %p213
    %p215 = pneg %p214
    // Predicated region
    $region41: #{act_first_res_block.1} parent=5 // pred_check
      _
    $region42: #{act_first_res_block.1} parent=5 // pred_check_branch
      %217 = sbr.rel (%p214) target = $region44
    $region43: #{act_first_res_block.1} parent=5 // pred_region
      %s218 = ssub.s32 %s12, 1
      %s219 = smul.u32 2, %s17
      %p220 = scmp.lt.s32.totalorder %s219, 3
      %s221 = scalar_select %p220, %s219, 3
      %s222 = smul.addr %s221, 8
      %s223 = scalar_lea.vmem %s0, %s222
      %p224 = pneg %p38
      %p225 = pneg %p35
      %p226 = pneg %p59
      %p227 = pneg %p56
      %p228 = pneg %p80
      %p229 = pneg %p77
      %p230 = pneg %p101
      %p231 = pneg %p98
      %p232 = pneg %p122
      %p233 = pneg %p119
      %p234 = pneg %p143
      %p235 = pneg %p140
      %p236 = pneg %p169
      %p237 = pneg %p166
      %s238 = smul.u32 2, %s17
      %p239 = scmp.lt.s32.totalorder %s238, 3
      %s240 = scalar_select %p239, %s238, 3
      %s241 = smul.addr %s240, 8
      %s242 = scalar_lea.vmem %s6, %s241
      %s243 = smul.u32 2, %s17
      %p244 = scmp.lt.s32.totalorder %s243, 3
      %s245 = scalar_select %p244, %s243, 3
      %s246 = smul.addr %s245, 8
      %s247 = scalar_lea.vmem %s0, %s246
      %s248 = smul.u32 2, %s17
      %s249 = smul.u32 2, %s17
      %p250 = scmp.lt.s32.totalorder %s249, 3
      %s251 = scalar_select %p250, %s249, 3
      %s252 = smul.addr %s251, 8
      %s253 = scalar_lea.vmem %s6, %s252
      %s254 = smul.u32 2, %s17
      %v256 = vld [vmem:[%s247] sm:$0xff]
      %v257 = vld [vmem:[%s247 + $0x8] sm:$0xff]
      %v258 = vld [vmem:[%s1] sm:$0xff]
      %v259 = vld [vmem:[%s1 + $0x8] sm:$0xff]
      %v260 = vmax.f32 %v256, 0.0
      %v261 = vmax.f32 %v257, 0.0
      %v262 = vrot.slane %v260, 7
      %v263 = vrot.slane %v261, 7
      %v264 = vlaneseq
      %v265 = vshrl.u32 %v264, 7
      %vm266 = vcmp.lt.s32.totalorder %v265, 1
      %v267 = vsel %vm266, %v262, %v263
      %v268 = vsel %vm266, %v263, %v262
      %270 = vset.pattern.permute.xlu0 0
      %271 = vperm.xlu0 %270, %v258
      %v272 = vpop.permute.xlu0 %271
      %275 = vset.pattern.permute.xlu0 0
      %276 = vperm.xlu0 %275, %v259
      %v277 = vpop.permute.xlu0 %276
      %v279 = vmul.f32 %v268, %v272
      %v280 = vmul.f32 %v267, %v277
      %v281 = vrot.slane %v260, 1
      %v282 = vrot.slane %v261, 1
      %vm283 = vcmp.lt.s32.totalorder %v265, 7
      %v284 = vsel %vm283, %v281, %v282
      %v285 = vsel %vm283, %v282, %v281
      %286 = vset.pattern.permute.xlu0 1
      %287 = vperm.xlu0 %286, %v258
      %v288 = vpop.permute.xlu0 %287
      %290 = vset.pattern.permute.xlu0 1
      %291 = vperm.xlu0 %290, %v259
      %v292 = vpop.permute.xlu0 %291
      %v294 = vmul.f32 %v284, %v288
      %v295 = vmul.f32 %v285, %v292
      %v296 = vpack.c.bf16 %v280, %v279
      %v297 = vpack.c.bf16 %v261, %v260
      %v298 = vpack.c.bf16 %v295, %v294
      %300 = vrot.lane.b32.xlu0 %v297, 64
      %v301 = vpop.permute.xlu0 %300
      %vm302 = vcmask 523264
      %v305 = vsel %vm302, %v296, %v301
      %v307 = vld [vmem:[%s2] sm:$0xf]
      %v308 = vld [vmem:[%s2 + $0x4] sm:$0xf]
      %v309 = vld [vmem:[%s2 + $0x8] sm:$0xf]
      %v310 = vld [vmem:[%s2 + $0xc] sm:$0xf]
      %v311 = vld [vmem:[%s2 + $0x10] sm:$0xf]
      %v312 = vld [vmem:[%s2 + $0x14] sm:$0xf]
      %v313 = vld [vmem:[%s2 + $0x18] sm:$0xf]
      %v314 = vld [vmem:[%s2 + $0x1c] sm:$0xf]
      %v315 = vld [vmem:[%s2 + $0x20] sm:$0xf]
      %v316 = vld [vmem:[%s2 + $0x24] sm:$0xf]
      %v317 = vld [vmem:[%s2 + $0x28] sm:$0xf]
      %v318 = vld [vmem:[%s2 + $0x2c] sm:$0xf]
      %v319 = vld [vmem:[%s2 + $0x30] sm:$0xf]
      %v320 = vld [vmem:[%s2 + $0x34] sm:$0xf]
      %v321 = vld [vmem:[%s2 + $0x38] sm:$0xf]
      %v322 = vld [vmem:[%s2 + $0x3c] sm:$0xf]
      %v323 = vld [vmem:[%s2 + $0x40] sm:$0xf]
      %v324 = vld [vmem:[%s2 + $0x44] sm:$0xf]
      %v325 = vld [vmem:[%s2 + $0x48] sm:$0xf]
      %v326 = vld [vmem:[%s2 + $0x4c] sm:$0xf]
      %v327 = vld [vmem:[%s2 + $0x50] sm:$0xf]
      %v328 = vld [vmem:[%s2 + $0x54] sm:$0xf]
      %v329 = vld [vmem:[%s2 + $0x58] sm:$0xf]
      %v330 = vld [vmem:[%s2 + $0x5c] sm:$0xf]
      %v331 = vld [vmem:[%s3] sm:$0x1]
      %v333 = vlaneseq
      %v334 = vshrl.u32 %v333, 7
      %v335 = vsub.s32 0, %v334
      %v336 = vrot.slane %v331, %v335
      %v362 = vunpack.c.l.b16 %v307
      %v363 = vunpack.c.l.b16 %v308
      %v364 = vunpack.c.l.b16 %v309
      %v365 = vunpack.c.l.b16 %v310
      %v366 = vunpack.c.l.b16 %v311
      %v367 = vunpack.c.l.b16 %v312
      %v368 = vunpack.c.l.b16 %v313
      %v369 = vunpack.c.l.b16 %v314
      %v370 = vunpack.c.l.b16 %v315
      %v371 = vunpack.c.l.b16 %v316
      %v372 = vunpack.c.l.b16 %v317
      %v373 = vunpack.c.l.b16 %v318
      %v374 = vunpack.c.l.b16 %v319
      %v375 = vunpack.c.l.b16 %v320
      %v376 = vunpack.c.l.b16 %v321
      %v377 = vunpack.c.l.b16 %v322
      %v378 = vunpack.c.l.b16 %v323
      %v379 = vunpack.c.l.b16 %v324
      %v380 = vunpack.c.l.b16 %v325
      %v381 = vunpack.c.l.b16 %v326
      %v382 = vunpack.c.l.b16 %v327
      %v383 = vunpack.c.l.b16 %v328
      %v384 = vunpack.c.l.b16 %v329
      %v385 = vunpack.c.l.b16 %v330
      %v386 = vpack.c.b16 %v363, %v362
      %v387 = vpack.c.b16 %v365, %v364
      %v388 = vpack.c.b16 %v367, %v366
      %v389 = vpack.c.b16 %v369, %v368
      %v390 = vpack.c.b16 %v371, %v370
      %v391 = vpack.c.b16 %v373, %v372
      %v392 = vpack.c.b16 %v375, %v374
      %v393 = vpack.c.b16 %v377, %v376
      %v394 = vpack.c.b16 %v379, %v378
      %v395 = vpack.c.b16 %v381, %v380
      %v396 = vpack.c.b16 %v383, %v382
      %v397 = vpack.c.b16 %v385, %v384
      %v411 = vsel %vm302, %v298, 0
      %413 = vmatprep.subr.bf16.mxu0 0
      %414 = vmatpush1.bf16.msra.mxu0 %v386
      %415 = vmatprep.subr.bf16.mxu0 0
      %416 = vmatpush1.bf16.msra.mxu0 %v387
      %417 = vmatprep.subr.bf16.mxu0 0
      %418 = vmatpush1.bf16.msra.mxu0 %v388
      %419 = vmatprep.subr.bf16.mxu0 0
      %420 = vmatpush1.bf16.msra.mxu0 %v389
      %421 = vmatprep.subr.bf16.mxu0 0
      %422 = vmatpush1.bf16.msra.mxu0 %v390
      %423 = vmatprep.subr.bf16.mxu0 0
      %424 = vmatpush1.bf16.msra.mxu0 %v391
      %425 = vmatprep.subr.bf16.mxu0 0
      %426 = vmatpush1.bf16.msra.mxu0 %v392
      %427 = vmatprep.subr.bf16.mxu0 0
      %428 = vmatpush1.bf16.msra.mxu0 %v393
      %429 = vmatprep.subr.bf16.mxu0 0
      %430 = vmatpush1.bf16.msra.mxu0 %v394
      %431 = vmatprep.subr.bf16.mxu0 0
      %432 = vmatpush1.bf16.msra.mxu0 %v395
      %433 = vmatprep.subr.bf16.mxu0 0
      %434 = vmatpush1.bf16.msra.mxu0 %v396
      %435 = vmatprep.subr.bf16.mxu0 0
      %436 = vmatpush1.bf16.msra.mxu0 %v397
      %437 = vmatprep.subr.bf16.mxu0 0
      %438 = vmatpush1.bf16.msra.mxu0 0
      %439 = vmatprep.subr.bf16.mxu0 0
      %440 = vmatpush1.bf16.msra.mxu0 0
      %441 = vmatprep.subr.bf16.mxu0 0
      %442 = vmatpush1.bf16.msra.mxu0 0
      %443 = vmatprep.subr.bf16.mxu0 0
      %444 = vmatpush1.bf16.msra.mxu0 0
      %445 = vmatprep.mubr.bf16.mxu0 %v411
      %446 = vmatmul.mubr.bf16.gmra.mrb[0].mxu0 %v305
      %v447 = vpop.f32.mrb[0].mxu0
      %v448 = vadd.f32 %v336, %v447
      %v449 = vpop.f32.mrb[0].mxu0
      %v450 = vpop.f32.mrb[0].mxu0
      %v451 = vadd.f32 %v336, %v450
      %v452 = vpop.f32.mrb[0].mxu0
      %453 = vdwg.mxu0
      %v454 = vmax.f32 %v448, 0.0
      %v455 = vmax.f32 %v451, 0.0
      %v456 = vrot.slane %v454, 7
      %v457 = vrot.slane %v455, 7
      %v458 = vsel %vm266, %v456, %v457
      %v459 = vsel %vm266, %v457, %v456
      %v460 = vmul.f32 %v459, %v272
      %v461 = vmul.f32 %v458, %v277
      %v462 = vrot.slane %v454, 1
      %v463 = vrot.slane %v455, 1
      %v464 = vsel %vm283, %v462, %v463
      %v465 = vsel %vm283, %v463, %v462
      %v466 = vmul.f32 %v464, %v288
      %v467 = vmul.f32 %v465, %v292
      %v468 = vpack.c.bf16 %v461, %v460
      %v469 = vpack.c.bf16 %v455, %v454
      %v470 = vpack.c.bf16 %v467, %v466
      %472 = vrot.lane.b32.xlu0 %v469, 64
      %v473 = vpop.permute.xlu0 %472
      %v476 = vsel %vm302, %v468, %v473
      %v478 = vld [vmem:[%s4] sm:$0xf]
      %v479 = vld [vmem:[%s4 + $0x4] sm:$0xf]
      %v480 = vld [vmem:[%s4 + $0x8] sm:$0xf]
      %v481 = vld [vmem:[%s4 + $0xc] sm:$0xf]
      %v482 = vld [vmem:[%s4 + $0x10] sm:$0xf]
      %v483 = vld [vmem:[%s4 + $0x14] sm:$0xf]
      %v484 = vld [vmem:[%s4 + $0x18] sm:$0xf]
      %v485 = vld [vmem:[%s4 + $0x1c] sm:$0xf]
      %v486 = vld [vmem:[%s4 + $0x20] sm:$0xf]
      %v487 = vld [vmem:[%s4 + $0x24] sm:$0xf]
      %v488 = vld [vmem:[%s4 + $0x28] sm:$0xf]
      %v489 = vld [vmem:[%s4 + $0x2c] sm:$0xf]
      %v490 = vld [vmem:[%s4 + $0x30] sm:$0xf]
      %v491 = vld [vmem:[%s4 + $0x34] sm:$0xf]
      %v492 = vld [vmem:[%s4 + $0x38] sm:$0xf]
      %v493 = vld [vmem:[%s4 + $0x3c] sm:$0xf]
      %v494 = vld [vmem:[%s4 + $0x40] sm:$0xf]
      %v495 = vld [vmem:[%s4 + $0x44] sm:$0xf]
      %v496 = vld [vmem:[%s4 + $0x48] sm:$0xf]
      %v497 = vld [vmem:[%s4 + $0x4c] sm:$0xf]
      %v498 = vld [vmem:[%s4 + $0x50] sm:$0xf]
      %v499 = vld [vmem:[%s4 + $0x54] sm:$0xf]
      %v500 = vld [vmem:[%s4 + $0x58] sm:$0xf]
      %v501 = vld [vmem:[%s4 + $0x5c] sm:$0xf]
      %v502 = vld [vmem:[%s5] sm:$0x1]
      %v504 = vlaneseq
      %v505 = vshrl.u32 %v504, 7
      %v506 = vsub.s32 0, %v505
      %v507 = vrot.slane %v502, %v506
      %v533 = vunpack.c.l.b16 %v478
      %v534 = vunpack.c.l.b16 %v479
      %v535 = vunpack.c.l.b16 %v480
      %v536 = vunpack.c.l.b16 %v481
      %v537 = vunpack.c.l.b16 %v482
      %v538 = vunpack.c.l.b16 %v483
      %v539 = vunpack.c.l.b16 %v484
      %v540 = vunpack.c.l.b16 %v485
      %v541 = vunpack.c.l.b16 %v486
      %v542 = vunpack.c.l.b16 %v487
      %v543 = vunpack.c.l.b16 %v488
      %v544 = vunpack.c.l.b16 %v489
      %v545 = vunpack.c.l.b16 %v490
      %v546 = vunpack.c.l.b16 %v491
      %v547 = vunpack.c.l.b16 %v492
      %v548 = vunpack.c.l.b16 %v493
      %v549 = vunpack.c.l.b16 %v494
      %v550 = vunpack.c.l.b16 %v495
      %v551 = vunpack.c.l.b16 %v496
      %v552 = vunpack.c.l.b16 %v497
      %v553 = vunpack.c.l.b16 %v498
      %v554 = vunpack.c.l.b16 %v499
      %v555 = vunpack.c.l.b16 %v500
      %v556 = vunpack.c.l.b16 %v501
      %v557 = vpack.c.b16 %v534, %v533
      %v558 = vpack.c.b16 %v536, %v535
      %v559 = vpack.c.b16 %v538, %v537
      %v560 = vpack.c.b16 %v540, %v539
      %v561 = vpack.c.b16 %v542, %v541
      %v562 = vpack.c.b16 %v544, %v543
      %v563 = vpack.c.b16 %v546, %v545
      %v564 = vpack.c.b16 %v548, %v547
      %v565 = vpack.c.b16 %v550, %v549
      %v566 = vpack.c.b16 %v552, %v551
      %v567 = vpack.c.b16 %v554, %v553
      %v568 = vpack.c.b16 %v556, %v555
      %v582 = vsel %vm302, %v470, 0
      %584 = vmatprep.subr.bf16.mxu0 0
      %585 = vmatpush1.bf16.msra.mxu0 %v557
      %586 = vmatprep.subr.bf16.mxu0 0
      %587 = vmatpush1.bf16.msra.mxu0 %v558
      %588 = vmatprep.subr.bf16.mxu0 0
      %589 = vmatpush1.bf16.msra.mxu0 %v559
      %590 = vmatprep.subr.bf16.mxu0 0
      %591 = vmatpush1.bf16.msra.mxu0 %v560
      %592 = vmatprep.subr.bf16.mxu0 0
      %593 = vmatpush1.bf16.msra.mxu0 %v561
      %594 = vmatprep.subr.bf16.mxu0 0
      %595 = vmatpush1.bf16.msra.mxu0 %v562
      %596 = vmatprep.subr.bf16.mxu0 0
      %597 = vmatpush1.bf16.msra.mxu0 %v563
      %598 = vmatprep.subr.bf16.mxu0 0
      %599 = vmatpush1.bf16.msra.mxu0 %v564
      %600 = vmatprep.subr.bf16.mxu0 0
      %601 = vmatpush1.bf16.msra.mxu0 %v565
      %602 = vmatprep.subr.bf16.mxu0 0
      %603 = vmatpush1.bf16.msra.mxu0 %v566
      %604 = vmatprep.subr.bf16.mxu0 0
      %605 = vmatpush1.bf16.msra.mxu0 %v567
      %606 = vmatprep.subr.bf16.mxu0 0
      %607 = vmatpush1.bf16.msra.mxu0 %v568
      %608 = vmatprep.subr.bf16.mxu0 0
      %609 = vmatpush1.bf16.msra.mxu0 0
      %610 = vmatprep.subr.bf16.mxu0 0
      %611 = vmatpush1.bf16.msra.mxu0 0
      %612 = vmatprep.subr.bf16.mxu0 0
      %613 = vmatpush1.bf16.msra.mxu0 0
      %614 = vmatprep.subr.bf16.mxu0 0
      %615 = vmatpush1.bf16.msra.mxu0 0
      %616 = vmatprep.mubr.bf16.mxu0 %v582
      %617 = vmatmul.mubr.bf16.gmra.mrb[0].mxu0 %v476
      %v618 = vpop.f32.mrb[0].mxu0
      %v619 = vadd.f32 %v507, %v618
      %v620 = vpop.f32.mrb[0].mxu0
      %v621 = vpop.f32.mrb[0].mxu0
      %v622 = vadd.f32 %v507, %v621
      %v623 = vpop.f32.mrb[0].mxu0
      %624 = vdwg.mxu0
      %v625 = vadd.f32 %v619, %v256
      %v626 = vadd.f32 %v622, %v257
      %627 = vst.msk [vmem:[%s253] sm:$0xff] %vm302, %v625
      %628 = vst.msk [vmem:[%s253 + $0x8] sm:$0xff] %vm302, %v626
      %s629 = smul.u32 2, %s17
      %p630 = scmp.lt.s32.totalorder %s629, 3
      %s631 = scalar_select %p630, %s629, 3
      %s632 = smul.addr %s631, 8
      %s633 = scalar_lea.vmem %s6, %s632
      // Predicated region
      $region45: #{act_first_res_block.1} parent=43 // pred_check
        %p634 = pneg %p166
      $region46: #{act_first_res_block.1} parent=43 // pred_check_branch
        %636 = sbr.rel (%p634) target = $region48
      $region47: #{act_first_res_block.1} parent=43 // pred_region
        %s637 = smul.u32 2, %s17
      $region48: #{act_first_res_block.1} parent=43 // pred_fallthru
        _
    $region44: #{act_first_res_block.1} parent=5 // pred_fallthru
      _
    %p638 = scmp.le.s32.totalorder 2, %s12
    // Predicated region
    $region49: #{act_first_res_block.1} parent=5 // pred_check
      %p639 = pneg %p638
    $region50: #{act_first_res_block.1} parent=5 // pred_check_branch
      %641 = sbr.rel (%p639) target = $region52
    $region51: #{act_first_res_block.1} parent=5 // pred_region
      %s642 = ssub.s32 %s12, 2
      // Predicated region
      $region53: #{act_first_res_block.1} parent=51 // pred_check
        %p643 = pneg %p172
      $region54: #{act_first_res_block.1} parent=51 // pred_check_branch
        %645 = sbr.rel (%p643) target = $region56
      $region55: #{act_first_res_block.1} parent=51 // pred_region
        %s646 = smul.u32 2, %s18
        %p647 = scmp.lt.s32.totalorder %s646, 3
        %s648 = scalar_select %p647, %s646, 3
        %s649 = smul.addr %s648, 8
        %s650 = scalar_lea.vmem %s6, %s649
      $region56: #{act_first_res_block.1} parent=51 // pred_fallthru
        _
    $region52: #{act_first_res_block.1} parent=5 // pred_fallthru
      _
  $region6: #{act_first_res_block.1} parent=0 // loop_footer
    %s16 = sadd.s32 1, %s12
  $region7: #{act_first_res_block.1} parent=0 // loop_footer_branch
    %11 = sbr.rel target = $region3
  $region8: #{act_first_res_block.1} parent=0 // loop_exit
    _

</llo_original>
